<compile_context>
chip_gen: v5e
topology: v5e:2x2
jax: 0.10.0
libtpu: 0.0.40
codegen_flags: <defaults>
</compile_context>

<pallas_src>
import functools
import math

import jax
import jax.numpy as jnp
from jax.experimental import pallas as pl
from jax.experimental.pallas import tpu as pltpu


def _mha_kernel(q_ref, k_ref, v_ref, wqkv_ref, bqkv_ref, wo_ref, bo_ref,
                o_ref, acc_ref, *, head_dim, heads_per_block, op_dtype):
    hblk = pl.program_id(1)
    Bt, S, D = q_ref.shape
    hd = head_dim
    bh = heads_per_block
    bhd = bh * hd
    rows = Bt * S
    inv_sqrt_d = 1.0 / math.sqrt(hd)

    @pl.when(hblk == 0)
    def _init():
        acc_ref[...] = jnp.zeros_like(acc_ref)

    # Flatten (Bt, S) -> rows for lane-dense projection matmuls.  S should be
    # a multiple of 8 (f32) / 16 (bf16) so this is a free sublane regrouping.
    xq = q_ref[...].reshape(rows, D)
    xk = k_ref[...].reshape(rows, D)
    xv = v_ref[...].reshape(rows, D)

    w = wqkv_ref[...]   # (1, 3, D, bh*hd)
    b = bqkv_ref[...]   # (1, 3, 1, bh*hd)

    # Head-block projections: N = bh*hd lanes, f32 accumulation on the MXU.
    q_h = jnp.dot(xq, w[0, 0], preferred_element_type=jnp.float32) + b[0, 0]
    k_h = jnp.dot(xk, w[0, 1], preferred_element_type=jnp.float32) + b[0, 1]
    v_h = jnp.dot(xv, w[0, 2], preferred_element_type=jnp.float32) + b[0, 2]

    q3 = q_h.reshape(Bt, S, bhd).astype(op_dtype)
    k3 = k_h.reshape(Bt, S, bhd).astype(op_dtype)
    v3 = v_h.reshape(Bt, S, bhd).astype(op_dtype)

    # Scaled dot-product attention, one head at a time inside the head block
    # (static unrolled loop; bh is small).  The score/PV matmuls inherently
    # have hd-sized contraction dims, so per-head batched einsums are fine.
    # TODO(synk): optional `mask` (masked_fill(mask == 0, -10000)) is not
    #             wired through; this implements the mask=None forward path.
    # TODO(synk): for long S, tile KV flash-style (online softmax) instead of
    #             materializing the (Bt, S, S) score tile per head.
    ctx_heads = []
    for i in range(bh):
        sl = slice(i * hd, (i + 1) * hd)
        qi, ki, vi = q3[:, :, sl], k3[:, :, sl], v3[:, :, sl]
        s = jnp.einsum("bqd,bkd->bqk", qi, ki,
                       preferred_element_type=jnp.float32) * inv_sqrt_d
        s = s - jnp.max(s, axis=-1, keepdims=True)
        p = jnp.exp(s)
        p = p * pl.reciprocal(jnp.sum(p, axis=-1, keepdims=True), approx=True)
        ctx_heads.append(
            jnp.einsum("bqk,bkd->bqd", p.astype(op_dtype), vi,
                       preferred_element_type=jnp.float32))

    # Fuse the head concat into the output projection: one lane-dense
    # (rows, bh*hd) @ (bh*hd, D) matmul accumulated into the f32 scratch.
    ctx = jnp.concatenate(ctx_heads, axis=-1).reshape(rows, bhd).astype(op_dtype)
    wo = wo_ref[...][0]   # (bh*hd, D)
    acc_ref[...] += jnp.dot(ctx, wo, preferred_element_type=jnp.float32)

    @pl.when(hblk == pl.num_programs(1) - 1)
    def _finalize():
        out = acc_ref[...] + bo_ref[...]
        o_ref[...] = out.reshape(Bt, S, D).astype(o_ref.dtype)


def _vmem_capacity_bytes(default=64 * 2 ** 20):
    # Per-generation VMEM capacity (v5e/v6e: 128 MiB, v7x: 64 MiB per TC).
    try:
        cap = getattr(pltpu.get_tpu_info(), "vmem_capacity_bytes", None)
        if cap:
            return int(cap)
    except Exception:
        pass
    return default


def _step_vmem_bytes(block_b, bh, S, D, hd, in_bytes, w_bytes):
    """Rough per-grid-step VMEM footprint (double-buffered IO + live temps)."""
    rows = block_b * S
    bhd = bh * hd
    act_io = 4 * 2 * rows * D * in_bytes                       # q,k,v + out blocks
    weights = 2 * (4 * D * bhd + 3 * bhd + D) * w_bytes        # wqkv + wo (+biases)
    acc = rows * D * 4                                         # f32 accumulator
    proj = 2 * 3 * rows * bhd * 4                              # f32 proj + casts
    ctx = 2 * rows * bhd * 4
    score = 3 * block_b * S * S * 4                            # one head's score live
    return act_io + weights + acc + proj + ctx + score


def multi_head_attention(q, k, v, params, n_head, *, block_b=None,
                         heads_per_block=None, attn_dtype=None):
    """q, k, v: [B, S, D]; params: torch.nn.Linear-style weights/biases."""
    B, S, D = q.shape
    assert D % n_head == 0
    hd = D // n_head

    in_bytes = jnp.dtype(q.dtype).itemsize
    w_bytes = jnp.dtype(params["wq"].dtype).itemsize
    op_dtype = jnp.dtype(attn_dtype) if attn_dtype is not None else jnp.dtype(q.dtype)

    cap = _vmem_capacity_bytes()
    budget = int(0.45 * cap)

    # Head block: biggest divisor of n_head that fits the budget, capped at
    # bh*hd <= 512 lanes.  bh == n_head additionally makes weights resident
    # (constant index map -> DMA'd once, revisits elided).
    if heads_per_block is None:
        heads_per_block = 1
        for d in range(1, n_head + 1):
            if n_head % d:
                continue
            if d * hd > 512:
                continue
            if _step_vmem_bytes(1, d, S, D, hd, in_bytes, w_bytes) <= budget:
                heads_per_block = d
    bh = heads_per_block
    assert n_head % bh == 0
    n_hblk = n_head // bh

    # Batch block: largest divisor of B (<= 8) whose footprint fits the budget.
    if block_b is None:
        block_b = 1
        for d in range(1, min(B, 8) + 1):
            if B % d:
                continue
            if _step_vmem_bytes(d, bh, S, D, hd, in_bytes, w_bytes) <= budget:
                block_b = d
    assert B % block_b == 0
    grid = (B // block_b, n_hblk)
    bhd = bh * hd

    # Pre-reshape the torch-Linear weights ONCE so the kernel never transposes:
    #   x @ W.T columns are head-major -> per-head-block slab (n_hblk, D, bh*hd)
    def qkv_block(w):
        return w.T.reshape(D, n_hblk, bhd).transpose(1, 0, 2)

    wqkv = jnp.stack([qkv_block(params["wq"]),
                      qkv_block(params["wk"]),
                      qkv_block(params["wv"])], axis=1)           # (n_hblk,3,D,bh*hd)
    bqkv = jnp.stack([params["bq"].reshape(n_hblk, 1, bhd),
                      params["bk"].reshape(n_hblk, 1, bhd),
                      params["bv"].reshape(n_hblk, 1, bhd)], axis=1)  # (n_hblk,3,1,bh*hd)
    wo = params["wo"].T.reshape(n_hblk, bhd, D)                   # (n_hblk,bh*hd,D)
    bo = params["bo"].reshape(1, D)

    seq_spec = pl.BlockSpec((block_b, S, D), lambda b, h: (b, 0, 0))
    wqkv_spec = pl.BlockSpec((1, 3, D, bhd), lambda b, h: (h, 0, 0, 0))
    bqkv_spec = pl.BlockSpec((1, 3, 1, bhd), lambda b, h: (h, 0, 0, 0))
    wo_spec = pl.BlockSpec((1, bhd, D), lambda b, h: (h, 0, 0))
    bo_spec = pl.BlockSpec((1, D), lambda b, h: (0, 0))

    est = _step_vmem_bytes(block_b, bh, S, D, hd, in_bytes, w_bytes)
    vmem_limit = int(min(0.9 * cap, max(32 * 2 ** 20, 2 * est)))

    flops = 8 * B * S * D * D + 4 * B * n_head * S * S * hd
    cost = pl.CostEstimate(
        flops=flops,
        transcendentals=B * n_head * S * S,
        bytes_accessed=4 * B * S * D * in_bytes + (4 * D * D + 4 * D) * w_bytes)

    kernel = functools.partial(_mha_kernel, head_dim=hd,
                               heads_per_block=bh, op_dtype=op_dtype)

    return pl.pallas_call(
        kernel,
        out_shape=jax.ShapeDtypeStruct((B, S, D), q.dtype),
        grid_spec=pltpu.PrefetchScalarGridSpec(
            num_scalar_prefetch=0,
            grid=grid,
            in_specs=[seq_spec, seq_spec, seq_spec,
                      wqkv_spec, bqkv_spec, wo_spec, bo_spec],
            out_specs=seq_spec,
            scratch_shapes=[pltpu.VMEM((block_b * S, D), jnp.float32)],
        ),
        compiler_params=pltpu.CompilerParams(
            dimension_semantics=("parallel", "arbitrary"),
            vmem_limit_bytes=vmem_limit),
        cost_estimate=cost,
    )(q, k, v, wqkv, bqkv, wo, bo)


def _reference(q, k, v, params, n_head):
    """Plain-JAX reference mirroring the PyTorch forward (mask=None, scale=1)."""
    B, S, D = q.shape
    hd = D // n_head

    def lin(x, w, b):
        return jnp.einsum("bsd,od->bso", x, w) + b

    def split(x):  # (B, S, D) -> (B, H, S, hd)
        return x.reshape(B, S, n_head, hd).transpose(0, 2, 1, 3)

    q_s = split(lin(q, params["wq"], params["bq"]))
    k_s = split(lin(k, params["wk"], params["bk"]))
    v_s = split(lin(v, params["wv"], params["bv"]))

    score = jnp.einsum("bhqd,bhkd->bhqk", q_s, k_s) / math.sqrt(hd)
    score = jax.nn.softmax(score, axis=-1)
    out = jnp.einsum("bhqk,bhkd->bhqd", score, v_s)
    out = out.transpose(0, 2, 1, 3).reshape(B, S, D)
    return lin(out, params["wo"], params["bo"])


if __name__ == "__main__":
    B, S, d_model, n_head = 2, 8, 32, 4

    key = jax.random.PRNGKey(0)
    keys = jax.random.split(key, 11)

    def w_init(k, shape, fan_in):
        bound = 1.0 / math.sqrt(fan_in)
        return jax.random.uniform(k, shape, jnp.float32, -bound, bound)

    params = {
        "wq": w_init(keys[0], (d_model, d_model), d_model),
        "bq": w_init(keys[1], (d_model,), d_model),
        "wk": w_init(keys[2], (d_model, d_model), d_model),
        "bk": w_init(keys[3], (d_model,), d_model),
        "wv": w_init(keys[4], (d_model, d_model), d_model),
        "bv": w_init(keys[5], (d_model,), d_model),
        "wo": w_init(keys[6], (d_model, d_model), d_model),
        "bo": w_init(keys[7], (d_model,), d_model),
    }

    q = jax.random.normal(keys[8], (B, S, d_model), jnp.float32)
    k = jax.random.normal(keys[9], (B, S, d_model), jnp.float32)
    v = jax.random.normal(keys[10], (B, S, d_model), jnp.float32)

    out = multi_head_attention(q, k, v, params, n_head)
    out = jax.block_until_ready(out)

    ref = _reference(q, k, v, params, n_head)
    assert out.shape == (B, S, d_model)
    # Tolerance loosened slightly vs exact softmax because the kernel uses the
    # EUP approximate reciprocal (relative error ~1e-4) for the softmax denom.
    assert jnp.allclose(out, ref, atol=1e-3, rtol=1e-3), (
        float(jnp.max(jnp.abs(out - ref))))

    print("KERNEL_OK")
</pallas_src>

<mosaic_0001>
module attributes {stable_mosaic.version = 11 : i64} {
  func.func @_mha_kernel(%arg0: i32, %arg1: i32, %arg2: memref<2x8x32xf32, #tpu.memory_space<vmem>>, %arg3: memref<2x8x32xf32, #tpu.memory_space<vmem>>, %arg4: memref<2x8x32xf32, #tpu.memory_space<vmem>>, %arg5: memref<1x3x32x32xf32, #tpu.memory_space<vmem>>, %arg6: memref<1x3x1x32xf32, #tpu.memory_space<vmem>>, %arg7: memref<1x32x32xf32, #tpu.memory_space<vmem>>, %arg8: memref<1x32xf32, #tpu.memory_space<vmem>>, %arg9: memref<2x8x32xf32, #tpu.memory_space<vmem>>, %arg10: memref<16x32xf32, #tpu.memory_space<vmem>>) attributes {dimension_semantics = [#tpu.dimension_semantics<parallel>, #tpu.dimension_semantics<arbitrary>], iteration_bounds = array<i64: 1, 1>, scalar_prefetch = 0 : i64, scratch_operands = 1 : i64, tpu.core_type = #tpu.core_type<tc>, window_params = [{transform_indices = @transform_0, window_bounds = array<i64: 2, 8, 32>}, {transform_indices = @transform_1, window_bounds = array<i64: 2, 8, 32>}, {transform_indices = @transform_2, window_bounds = array<i64: 2, 8, 32>}, {transform_indices = @transform_3, window_bounds = array<i64: 1, 3, 32, 32>}, {transform_indices = @transform_4, window_bounds = array<i64: 1, 3, 1, 32>}, {transform_indices = @transform_5, window_bounds = array<i64: 1, 32, 32>}, {pipeline_mode = #tpu.pipeline_mode<synchronous>, transform_indices = @transform_6, window_bounds = array<i64: 1, 32>}, {transform_indices = @transform_7, window_bounds = array<i64: 2, 8, 32>}]} {
    %c0_i32 = arith.constant 0 : i32
    %0 = arith.cmpi eq, %arg1, %c0_i32 : i32
    %1 = arith.extui %0 : i1 to i32
    %c0_i32_0 = arith.constant 0 : i32
    %2 = arith.cmpi ne, %1, %c0_i32_0 : i32
    scf.if %2 {
      %cst_49 = arith.constant 0.000000e+00 : f32
      %114 = vector.broadcast %cst_49 : f32 to vector<16x32xf32>
      %c0_50 = arith.constant 0 : index
      %c0_51 = arith.constant 0 : index
      %115 = vector.load %arg10[%c0_50, %c0_51] : memref<16x32xf32, #tpu.memory_space<vmem>>, vector<16x32xf32>
      tpu.vector_store %arg10[%c0_50, %c0_51], %114 {strides = array<i32>} : memref<16x32xf32, #tpu.memory_space<vmem>>, vector<16x32xf32>,
    } else {
    }
    %c0 = arith.constant 0 : index
    %c0_1 = arith.constant 0 : index
    %c0_2 = arith.constant 0 : index
    %3 = vector.load %arg2[%c0, %c0_1, %c0_2] : memref<2x8x32xf32, #tpu.memory_space<vmem>>, vector<2x8x32xf32>
    %4 = vector.shape_cast %3 : vector<2x8x32xf32> to vector<16x32xf32>
    %c0_3 = arith.constant 0 : index
    %c0_4 = arith.constant 0 : index
    %c0_5 = arith.constant 0 : index
    %5 = vector.load %arg3[%c0_3, %c0_4, %c0_5] : memref<2x8x32xf32, #tpu.memory_space<vmem>>, vector<2x8x32xf32>
    %6 = vector.shape_cast %5 : vector<2x8x32xf32> to vector<16x32xf32>
    %c0_6 = arith.constant 0 : index
    %c0_7 = arith.constant 0 : index
    %c0_8 = arith.constant 0 : index
    %7 = vector.load %arg4[%c0_6, %c0_7, %c0_8] : memref<2x8x32xf32, #tpu.memory_space<vmem>>, vector<2x8x32xf32>
    %8 = vector.shape_cast %7 : vector<2x8x32xf32> to vector<16x32xf32>
    %c0_9 = arith.constant 0 : index
    %c0_10 = arith.constant 0 : index
    %c0_11 = arith.constant 0 : index
    %c0_12 = arith.constant 0 : index
    %9 = vector.load %arg5[%c0_9, %c0_10, %c0_11, %c0_12] : memref<1x3x32x32xf32, #tpu.memory_space<vmem>>, vector<1x3x32x32xf32>
    %c0_13 = arith.constant 0 : index
    %c0_14 = arith.constant 0 : index
    %c0_15 = arith.constant 0 : index
    %c0_16 = arith.constant 0 : index
    %10 = vector.load %arg6[%c0_13, %c0_14, %c0_15, %c0_16] : memref<1x3x1x32xf32, #tpu.memory_space<vmem>>, vector<1x3x1x32xf32>
    %11 = vector.extract_strided_slice %9 {offsets = [0, 0, 0, 0], sizes = [1, 1, 32, 32], strides = [1, 1, 1, 1]} : vector<1x3x32x32xf32> to vector<1x1x32x32xf32>
    %12 = vector.shape_cast %11 : vector<1x1x32x32xf32> to vector<32x32xf32>
    %cst = arith.constant dense<0.000000e+00> : vector<16x32xf32>
    %13 = tpu.matmul %4, %12, %cst {dimension_numbers = #tpu.dot_dimension_numbers<[1], [0], [0], [1], [0, 0, 1, 1], [], []>} : vector<16x32xf32>, vector<32x32xf32>, vector<16x32xf32> -> vector<16x32xf32>
    %14 = vector.extract_strided_slice %10 {offsets = [0, 0, 0, 0], sizes = [1, 1, 1, 32], strides = [1, 1, 1, 1]} : vector<1x3x1x32xf32> to vector<1x1x1x32xf32>
    %15 = vector.shape_cast %14 : vector<1x1x1x32xf32> to vector<1x32xf32>
    %16 = vector.broadcast %15 : vector<1x32xf32> to vector<16x32xf32>
    %17 = arith.addf %13, %16 : vector<16x32xf32>
    %18 = vector.extract_strided_slice %9 {offsets = [0, 1, 0, 0], sizes = [1, 1, 32, 32], strides = [1, 1, 1, 1]} : vector<1x3x32x32xf32> to vector<1x1x32x32xf32>
    %19 = vector.shape_cast %18 : vector<1x1x32x32xf32> to vector<32x32xf32>
    %cst_17 = arith.constant dense<0.000000e+00> : vector<16x32xf32>
    %20 = tpu.matmul %6, %19, %cst_17 {dimension_numbers = #tpu.dot_dimension_numbers<[1], [0], [0], [1], [0, 0, 1, 1], [], []>} : vector<16x32xf32>, vector<32x32xf32>, vector<16x32xf32> -> vector<16x32xf32>
    %21 = vector.extract_strided_slice %10 {offsets = [0, 1, 0, 0], sizes = [1, 1, 1, 32], strides = [1, 1, 1, 1]} : vector<1x3x1x32xf32> to vector<1x1x1x32xf32>
    %22 = vector.shape_cast %21 : vector<1x1x1x32xf32> to vector<1x32xf32>
    %23 = vector.broadcast %22 : vector<1x32xf32> to vector<16x32xf32>
    %24 = arith.addf %20, %23 : vector<16x32xf32>
    %25 = vector.extract_strided_slice %9 {offsets = [0, 2, 0, 0], sizes = [1, 1, 32, 32], strides = [1, 1, 1, 1]} : vector<1x3x32x32xf32> to vector<1x1x32x32xf32>
    %26 = vector.shape_cast %25 : vector<1x1x32x32xf32> to vector<32x32xf32>
    %cst_18 = arith.constant dense<0.000000e+00> : vector<16x32xf32>
    %27 = tpu.matmul %8, %26, %cst_18 {dimension_numbers = #tpu.dot_dimension_numbers<[1], [0], [0], [1], [0, 0, 1, 1], [], []>} : vector<16x32xf32>, vector<32x32xf32>, vector<16x32xf32> -> vector<16x32xf32>
    %28 = vector.extract_strided_slice %10 {offsets = [0, 2, 0, 0], sizes = [1, 1, 1, 32], strides = [1, 1, 1, 1]} : vector<1x3x1x32xf32> to vector<1x1x1x32xf32>
    %29 = vector.shape_cast %28 : vector<1x1x1x32xf32> to vector<1x32xf32>
    %30 = vector.broadcast %29 : vector<1x32xf32> to vector<16x32xf32>
    %31 = arith.addf %27, %30 : vector<16x32xf32>
    %32 = vector.shape_cast %17 : vector<16x32xf32> to vector<2x8x32xf32>
    %33 = vector.shape_cast %24 : vector<16x32xf32> to vector<2x8x32xf32>
    %34 = vector.shape_cast %31 : vector<16x32xf32> to vector<2x8x32xf32>
    %35 = vector.extract_strided_slice %32 {offsets = [0, 0, 0], sizes = [2, 8, 8], strides = [1, 1, 1]} : vector<2x8x32xf32> to vector<2x8x8xf32>
    %36 = vector.extract_strided_slice %33 {offsets = [0, 0, 0], sizes = [2, 8, 8], strides = [1, 1, 1]} : vector<2x8x32xf32> to vector<2x8x8xf32>
    %37 = vector.extract_strided_slice %34 {offsets = [0, 0, 0], sizes = [2, 8, 8], strides = [1, 1, 1]} : vector<2x8x32xf32> to vector<2x8x8xf32>
    "tpu.trace_start"() <{level = 10 : i32, message = "bqd,bkd->bqk"}> : () -> ()
    %cst_19 = arith.constant dense<0.000000e+00> : vector<2x8x8xf32>
    %38 = tpu.matmul %35, %36, %cst_19 {dimension_numbers = #tpu.dot_dimension_numbers<[2], [2], [1], [1], [0, 0, 0, 1, 1, 1], [0], [0]>} : vector<2x8x8xf32>, vector<2x8x8xf32>, vector<2x8x8xf32> -> vector<2x8x8xf32>
    "tpu.trace_stop"() : () -> ()
    %cst_20 = arith.constant 0.353553385 : f32
    %39 = vector.broadcast %cst_20 : f32 to vector<2x8x8xf32>
    %40 = arith.mulf %38, %39 : vector<2x8x8xf32>
    %cst_21 = arith.constant dense<0xFF800000> : vector<2x8xf32>
    %41 = vector.multi_reduction <maximumf>, %40, %cst_21 [2] : vector<2x8x8xf32> to vector<2x8xf32>
    %42 = vector.shape_cast %41 : vector<2x8xf32> to vector<2x8x1xf32>
    %43 = vector.broadcast %42 : vector<2x8x1xf32> to vector<2x8x8xf32>
    %44 = arith.subf %40, %43 : vector<2x8x8xf32>
    %45 = math.exp %44 : vector<2x8x8xf32>
    %cst_22 = arith.constant dense<0.000000e+00> : vector<2x8xf32>
    %46 = vector.multi_reduction <add>, %45, %cst_22 [2] : vector<2x8x8xf32> to vector<2x8xf32>
    %47 = vector.shape_cast %46 : vector<2x8xf32> to vector<2x8x1xf32>
    %48 = tpu.reciprocal %47 {approx = true} : vector<2x8x1xf32> -> vector<2x8x1xf32>
    %49 = vector.broadcast %48 : vector<2x8x1xf32> to vector<2x8x8xf32>
    %50 = arith.mulf %45, %49 : vector<2x8x8xf32>
    "tpu.trace_start"() <{level = 10 : i32, message = "bqk,bkd->bqd"}> : () -> ()
    %cst_23 = arith.constant dense<0.000000e+00> : vector<2x8x8xf32>
    %51 = tpu.matmul %50, %37, %cst_23 {dimension_numbers = #tpu.dot_dimension_numbers<[2], [1], [1], [2], [0, 0, 0, 1, 1, 2], [0], [0]>} : vector<2x8x8xf32>, vector<2x8x8xf32>, vector<2x8x8xf32> -> vector<2x8x8xf32>
    "tpu.trace_stop"() : () -> ()
    %52 = vector.extract_strided_slice %32 {offsets = [0, 0, 8], sizes = [2, 8, 8], strides = [1, 1, 1]} : vector<2x8x32xf32> to vector<2x8x8xf32>
    %53 = vector.extract_strided_slice %33 {offsets = [0, 0, 8], sizes = [2, 8, 8], strides = [1, 1, 1]} : vector<2x8x32xf32> to vector<2x8x8xf32>
    %54 = vector.extract_strided_slice %34 {offsets = [0, 0, 8], sizes = [2, 8, 8], strides = [1, 1, 1]} : vector<2x8x32xf32> to vector<2x8x8xf32>
    "tpu.trace_start"() <{level = 10 : i32, message = "bqd,bkd->bqk"}> : () -> ()
    %cst_24 = arith.constant dense<0.000000e+00> : vector<2x8x8xf32>
    %55 = tpu.matmul %52, %53, %cst_24 {dimension_numbers = #tpu.dot_dimension_numbers<[2], [2], [1], [1], [0, 0, 0, 1, 1, 1], [0], [0]>} : vector<2x8x8xf32>, vector<2x8x8xf32>, vector<2x8x8xf32> -> vector<2x8x8xf32>
    "tpu.trace_stop"() : () -> ()
    %cst_25 = arith.constant 0.353553385 : f32
    %56 = vector.broadcast %cst_25 : f32 to vector<2x8x8xf32>
    %57 = arith.mulf %55, %56 : vector<2x8x8xf32>
    %cst_26 = arith.constant dense<0xFF800000> : vector<2x8xf32>
    %58 = vector.multi_reduction <maximumf>, %57, %cst_26 [2] : vector<2x8x8xf32> to vector<2x8xf32>
    %59 = vector.shape_cast %58 : vector<2x8xf32> to vector<2x8x1xf32>
    %60 = vector.broadcast %59 : vector<2x8x1xf32> to vector<2x8x8xf32>
    %61 = arith.subf %57, %60 : vector<2x8x8xf32>
    %62 = math.exp %61 : vector<2x8x8xf32>
    %cst_27 = arith.constant dense<0.000000e+00> : vector<2x8xf32>
    %63 = vector.multi_reduction <add>, %62, %cst_27 [2] : vector<2x8x8xf32> to vector<2x8xf32>
    %64 = vector.shape_cast %63 : vector<2x8xf32> to vector<2x8x1xf32>
    %65 = tpu.reciprocal %64 {approx = true} : vector<2x8x1xf32> -> vector<2x8x1xf32>
    %66 = vector.broadcast %65 : vector<2x8x1xf32> to vector<2x8x8xf32>
    %67 = arith.mulf %62, %66 : vector<2x8x8xf32>
    "tpu.trace_start"() <{level = 10 : i32, message = "bqk,bkd->bqd"}> : () -> ()
    %cst_28 = arith.constant dense<0.000000e+00> : vector<2x8x8xf32>
    %68 = tpu.matmul %67, %54, %cst_28 {dimension_numbers = #tpu.dot_dimension_numbers<[2], [1], [1], [2], [0, 0, 0, 1, 1, 2], [0], [0]>} : vector<2x8x8xf32>, vector<2x8x8xf32>, vector<2x8x8xf32> -> vector<2x8x8xf32>
    "tpu.trace_stop"() : () -> ()
    %69 = vector.extract_strided_slice %32 {offsets = [0, 0, 16], sizes = [2, 8, 8], strides = [1, 1, 1]} : vector<2x8x32xf32> to vector<2x8x8xf32>
    %70 = vector.extract_strided_slice %33 {offsets = [0, 0, 16], sizes = [2, 8, 8], strides = [1, 1, 1]} : vector<2x8x32xf32> to vector<2x8x8xf32>
    %71 = vector.extract_strided_slice %34 {offsets = [0, 0, 16], sizes = [2, 8, 8], strides = [1, 1, 1]} : vector<2x8x32xf32> to vector<2x8x8xf32>
    "tpu.trace_start"() <{level = 10 : i32, message = "bqd,bkd->bqk"}> : () -> ()
    %cst_29 = arith.constant dense<0.000000e+00> : vector<2x8x8xf32>
    %72 = tpu.matmul %69, %70, %cst_29 {dimension_numbers = #tpu.dot_dimension_numbers<[2], [2], [1], [1], [0, 0, 0, 1, 1, 1], [0], [0]>} : vector<2x8x8xf32>, vector<2x8x8xf32>, vector<2x8x8xf32> -> vector<2x8x8xf32>
    "tpu.trace_stop"() : () -> ()
    %cst_30 = arith.constant 0.353553385 : f32
    %73 = vector.broadcast %cst_30 : f32 to vector<2x8x8xf32>
    %74 = arith.mulf %72, %73 : vector<2x8x8xf32>
    %cst_31 = arith.constant dense<0xFF800000> : vector<2x8xf32>
    %75 = vector.multi_reduction <maximumf>, %74, %cst_31 [2] : vector<2x8x8xf32> to vector<2x8xf32>
    %76 = vector.shape_cast %75 : vector<2x8xf32> to vector<2x8x1xf32>
    %77 = vector.broadcast %76 : vector<2x8x1xf32> to vector<2x8x8xf32>
    %78 = arith.subf %74, %77 : vector<2x8x8xf32>
    %79 = math.exp %78 : vector<2x8x8xf32>
    %cst_32 = arith.constant dense<0.000000e+00> : vector<2x8xf32>
    %80 = vector.multi_reduction <add>, %79, %cst_32 [2] : vector<2x8x8xf32> to vector<2x8xf32>
    %81 = vector.shape_cast %80 : vector<2x8xf32> to vector<2x8x1xf32>
    %82 = tpu.reciprocal %81 {approx = true} : vector<2x8x1xf32> -> vector<2x8x1xf32>
    %83 = vector.broadcast %82 : vector<2x8x1xf32> to vector<2x8x8xf32>
    %84 = arith.mulf %79, %83 : vector<2x8x8xf32>
    "tpu.trace_start"() <{level = 10 : i32, message = "bqk,bkd->bqd"}> : () -> ()
    %cst_33 = arith.constant dense<0.000000e+00> : vector<2x8x8xf32>
    %85 = tpu.matmul %84, %71, %cst_33 {dimension_numbers = #tpu.dot_dimension_numbers<[2], [1], [1], [2], [0, 0, 0, 1, 1, 2], [0], [0]>} : vector<2x8x8xf32>, vector<2x8x8xf32>, vector<2x8x8xf32> -> vector<2x8x8xf32>
    "tpu.trace_stop"() : () -> ()
    %86 = vector.extract_strided_slice %32 {offsets = [0, 0, 24], sizes = [2, 8, 8], strides = [1, 1, 1]} : vector<2x8x32xf32> to vector<2x8x8xf32>
    %87 = vector.extract_strided_slice %33 {offsets = [0, 0, 24], sizes = [2, 8, 8], strides = [1, 1, 1]} : vector<2x8x32xf32> to vector<2x8x8xf32>
    %88 = vector.extract_strided_slice %34 {offsets = [0, 0, 24], sizes = [2, 8, 8], strides = [1, 1, 1]} : vector<2x8x32xf32> to vector<2x8x8xf32>
    "tpu.trace_start"() <{level = 10 : i32, message = "bqd,bkd->bqk"}> : () -> ()
    %cst_34 = arith.constant dense<0.000000e+00> : vector<2x8x8xf32>
    %89 = tpu.matmul %86, %87, %cst_34 {dimension_numbers = #tpu.dot_dimension_numbers<[2], [2], [1], [1], [0, 0, 0, 1, 1, 1], [0], [0]>} : vector<2x8x8xf32>, vector<2x8x8xf32>, vector<2x8x8xf32> -> vector<2x8x8xf32>
    "tpu.trace_stop"() : () -> ()
    %cst_35 = arith.constant 0.353553385 : f32
    %90 = vector.broadcast %cst_35 : f32 to vector<2x8x8xf32>
    %91 = arith.mulf %89, %90 : vector<2x8x8xf32>
    %cst_36 = arith.constant dense<0xFF800000> : vector<2x8xf32>
    %92 = vector.multi_reduction <maximumf>, %91, %cst_36 [2] : vector<2x8x8xf32> to vector<2x8xf32>
    %93 = vector.shape_cast %92 : vector<2x8xf32> to vector<2x8x1xf32>
    %94 = vector.broadcast %93 : vector<2x8x1xf32> to vector<2x8x8xf32>
    %95 = arith.subf %91, %94 : vector<2x8x8xf32>
    %96 = math.exp %95 : vector<2x8x8xf32>
    %cst_37 = arith.constant dense<0.000000e+00> : vector<2x8xf32>
    %97 = vector.multi_reduction <add>, %96, %cst_37 [2] : vector<2x8x8xf32> to vector<2x8xf32>
    %98 = vector.shape_cast %97 : vector<2x8xf32> to vector<2x8x1xf32>
    %99 = tpu.reciprocal %98 {approx = true} : vector<2x8x1xf32> -> vector<2x8x1xf32>
    %100 = vector.broadcast %99 : vector<2x8x1xf32> to vector<2x8x8xf32>
    %101 = arith.mulf %96, %100 : vector<2x8x8xf32>
    "tpu.trace_start"() <{level = 10 : i32, message = "bqk,bkd->bqd"}> : () -> ()
    %cst_38 = arith.constant dense<0.000000e+00> : vector<2x8x8xf32>
    %102 = tpu.matmul %101, %88, %cst_38 {dimension_numbers = #tpu.dot_dimension_numbers<[2], [1], [1], [2], [0, 0, 0, 1, 1, 2], [0], [0]>} : vector<2x8x8xf32>, vector<2x8x8xf32>, vector<2x8x8xf32> -> vector<2x8x8xf32>
    "tpu.trace_stop"() : () -> ()
    %103 = tpu.concatenate %51, %68, %85, %102 in 2 : vector<2x8x8xf32>, vector<2x8x8xf32>, vector<2x8x8xf32>, vector<2x8x8xf32> -> vector<2x8x32xf32>
    %104 = vector.shape_cast %103 : vector<2x8x32xf32> to vector<16x32xf32>
    %c0_39 = arith.constant 0 : index
    %c0_40 = arith.constant 0 : index
    %c0_41 = arith.constant 0 : index
    %105 = vector.load %arg7[%c0_39, %c0_40, %c0_41] : memref<1x32x32xf32, #tpu.memory_space<vmem>>, vector<1x32x32xf32>
    %106 = vector.shape_cast %105 : vector<1x32x32xf32> to vector<32x32xf32>
    %c0_42 = arith.constant 0 : index
    %c0_43 = arith.constant 0 : index
    %107 = vector.load %arg10[%c0_42, %c0_43] : memref<16x32xf32, #tpu.memory_space<vmem>>, vector<16x32xf32>
    %cst_44 = arith.constant dense<0.000000e+00> : vector<16x32xf32>
    %108 = tpu.matmul %104, %106, %cst_44 {dimension_numbers = #tpu.dot_dimension_numbers<[1], [0], [0], [1], [0, 0, 1, 1], [], []>} : vector<16x32xf32>, vector<32x32xf32>, vector<16x32xf32> -> vector<16x32xf32>
    %109 = arith.addf %107, %108 : vector<16x32xf32>
    %c0_45 = arith.constant 0 : index
    %c0_46 = arith.constant 0 : index
    %110 = vector.load %arg10[%c0_45, %c0_46] : memref<16x32xf32, #tpu.memory_space<vmem>>, vector<16x32xf32>
    tpu.vector_store %arg10[%c0_45, %c0_46], %109 {strides = array<i32>} : memref<16x32xf32, #tpu.memory_space<vmem>>, vector<16x32xf32>,
    %c0_i32_47 = arith.constant 0 : i32
    %111 = arith.cmpi eq, %arg1, %c0_i32_47 : i32
    %112 = arith.extui %111 : i1 to i32
    %c0_i32_48 = arith.constant 0 : i32
    %113 = arith.cmpi ne, %112, %c0_i32_48 : i32
    scf.if %113 {
      %c0_49 = arith.constant 0 : index
      %c0_50 = arith.constant 0 : index
      %114 = vector.load %arg10[%c0_49, %c0_50] : memref<16x32xf32, #tpu.memory_space<vmem>>, vector<16x32xf32>
      %c0_51 = arith.constant 0 : index
      %c0_52 = arith.constant 0 : index
      %115 = vector.load %arg8[%c0_51, %c0_52] : memref<1x32xf32, #tpu.memory_space<vmem>>, vector<1x32xf32>
      %116 = vector.broadcast %115 : vector<1x32xf32> to vector<16x32xf32>
      %117 = arith.addf %114, %116 : vector<16x32xf32>
      %118 = vector.shape_cast %117 : vector<16x32xf32> to vector<2x8x32xf32>
      %c0_53 = arith.constant 0 : index
      %c0_54 = arith.constant 0 : index
      %c0_55 = arith.constant 0 : index
      %119 = vector.load %arg9[%c0_53, %c0_54, %c0_55] : memref<2x8x32xf32, #tpu.memory_space<vmem>>, vector<2x8x32xf32>
      tpu.vector_store %arg9[%c0_53, %c0_54, %c0_55], %118 {strides = array<i32>} : memref<2x8x32xf32, #tpu.memory_space<vmem>>, vector<2x8x32xf32>,
    } else {
    }
    return
  }
  func.func @transform_0(%arg0: i32, %arg1: i32) -> (i32, i32, i32) {
    %c0_i32 = arith.constant 0 : i32
    %c0_i32_0 = arith.constant 0 : i32
    %c0_i32_1 = arith.constant 0 : i32
    return %arg0, %c0_i32, %c0_i32_0 : i32, i32, i32
  }
  func.func @transform_1(%arg0: i32, %arg1: i32) -> (i32, i32, i32) {
    %c0_i32 = arith.constant 0 : i32
    %c0_i32_0 = arith.constant 0 : i32
    %c0_i32_1 = arith.constant 0 : i32
    return %arg0, %c0_i32, %c0_i32_0 : i32, i32, i32
  }
  func.func @transform_2(%arg0: i32, %arg1: i32) -> (i32, i32, i32) {
    %c0_i32 = arith.constant 0 : i32
    %c0_i32_0 = arith.constant 0 : i32
    %c0_i32_1 = arith.constant 0 : i32
    return %arg0, %c0_i32, %c0_i32_0 : i32, i32, i32
  }
  func.func @transform_3(%arg0: i32, %arg1: i32) -> (i32, i32, i32, i32) {
    %c0_i32 = arith.constant 0 : i32
    %c0_i32_0 = arith.constant 0 : i32
    %c0_i32_1 = arith.constant 0 : i32
    %c0_i32_2 = arith.constant 0 : i32
    return %arg1, %c0_i32, %c0_i32_0, %c0_i32_1 : i32, i32, i32, i32
  }
  func.func @transform_4(%arg0: i32, %arg1: i32) -> (i32, i32, i32, i32) {
    %c0_i32 = arith.constant 0 : i32
    %c0_i32_0 = arith.constant 0 : i32
    %c0_i32_1 = arith.constant 0 : i32
    %c0_i32_2 = arith.constant 0 : i32
    return %arg1, %c0_i32, %c0_i32_0, %c0_i32_1 : i32, i32, i32, i32
  }
  func.func @transform_5(%arg0: i32, %arg1: i32) -> (i32, i32, i32) {
    %c0_i32 = arith.constant 0 : i32
    %c0_i32_0 = arith.constant 0 : i32
    %c0_i32_1 = arith.constant 0 : i32
    return %arg1, %c0_i32, %c0_i32_0 : i32, i32, i32
  }
  func.func @transform_6(%arg0: i32, %arg1: i32) -> (i32, i32) {
    %c0_i32 = arith.constant 0 : i32
    %c0_i32_0 = arith.constant 0 : i32
    %c0_i32_1 = arith.constant 0 : i32
    return %c0_i32, %c0_i32_0 : i32, i32
  }
  func.func @transform_7(%arg0: i32, %arg1: i32) -> (i32, i32, i32) {
    %c0_i32 = arith.constant 0 : i32
    %c0_i32_0 = arith.constant 0 : i32
    %c0_i32_1 = arith.constant 0 : i32
    return %arg0, %c0_i32, %c0_i32_0 : i32, i32, i32
  }
}

</mosaic_0001>

<llo_original>
// kernel: tpu_custom_call.1
$region0: #{tpu_custom_call.1}
  #allocation0 [shape = 'u32[]', space=smem, size = 0x4, offset = 0x4, fixed_abs, tag = 'smem constant byte address 0x4 - core index']
  #allocation1 [shape = 'u32[72,128]{1,0:T(1,128)}', space=vmem, size = 0x9000, scoped, tag = 'internal scratch']
  #allocation2 [shape = 'f32[16,32]{1,0:T(8,128)}', space=vmem, size = 0x2000, scoped, tag = 'scratch operand']
  %s0 = inlined_call_operand.hbm [shape: f32[2,8,32], index: 0, kind: input, shape index: {}]
  %s1 = inlined_call_operand.hbm [shape: f32[2,8,32], index: 1, kind: input, shape index: {}]
  %s2 = inlined_call_operand.hbm [shape: f32[2,8,32], index: 2, kind: input, shape index: {}]
  %s3 = inlined_call_operand.hbm [shape: f32[1,3,32,32], index: 3, kind: input, shape index: {}]
  %s4 = inlined_call_operand.vmem [shape: f32[1,3,1,32], index: 4, kind: input, shape index: {}]
  %s5 = inlined_call_operand.hbm [shape: f32[1,32,32], index: 5, kind: input, shape index: {}]
  %s6 = inlined_call_operand.vmem [shape: f32[1,32], index: 6, kind: input, shape index: {}]
  %s7 = inlined_call_operand.hbm [shape: f32[2,8,32], index: 7, kind: output, shape index: {}]
  %s8 = sld [smem:[#allocation0]]
  $region66: #{tpu_custom_call.1} parent=0
    _
  %s10 = ssub.s32 1, %s8
  %s11 = scalar_select 0, %s10, %s8
  $region1: #{tpu_custom_call.1} parent=0
    #allocation3 [shape = 'u8[8192]{0}', space=vmem, size = 0x2000, scoped, tag = 'input window, operand 0, single buffered']
    #allocation4 [shape = 's32[1]{0}', space=sflag, size = 0x4, scoped, tag = 'scoped memory for tpu_custom_call.1']
    #allocation5 [shape = 's32[1]{0}', space=sflag, size = 0x4, scoped, tag = 'scoped memory for tpu_custom_call.1']
    #allocation6 [shape = 'u8[8192]{0}', space=vmem, size = 0x2000, scoped, tag = 'input window, operand 1, single buffered']
    #allocation7 [shape = 's32[1]{0}', space=sflag, size = 0x4, scoped, tag = 'scoped memory for tpu_custom_call.1']
    #allocation8 [shape = 'u8[8192]{0}', space=vmem, size = 0x2000, scoped, tag = 'input window, operand 2, single buffered']
    #allocation9 [shape = 'u8[49152]{0}', space=vmem, size = 0xc000, scoped, tag = 'input window, operand 3, single buffered']
    #allocation10 [shape = 's32[1]{0}', space=sflag, size = 0x4, scoped, tag = 'scoped memory for tpu_custom_call.1']
    #allocation11 [shape = 'u8[16384]{0}', space=vmem, size = 0x4000, scoped, tag = 'input window, operand 5, single buffered']
    #allocation12 [shape = 'u8[8192]{0}', space=vmem, size = 0x2000, scoped, tag = 'output window, operand 0, single buffered']
    %12 = vsyncpa [#allocation4], 0
    %13 = vsyncpa [#allocation7], 0
    %14 = vsyncpa [#allocation10], 0
    %15 = vsyncpa [#allocation5], 0
    // Predicated region
    $region2: #{tpu_custom_call.1} parent=1 // pred_check
      _
    $region3: #{tpu_custom_call.1} parent=1 // pred_check_branch
      %17 = sbr.rel (0) target = $region5
    $region4: #{tpu_custom_call.1} parent=1 // pred_region
      %19 = vsyncadd [#allocation4], 0
      %s20 = sshll.u32 %s0, 4
      %s21 = int_to_ptr.hbm [resolvable:$true] %s20
      %s22 = sshll.u32 [#allocation3], 4
      %s23 = int_to_ptr.vmem [resolvable:$true] %s22
      %28 = dma.hbm_to_vmem [thread:$0]  %s21, 256, %s23, [#allocation4], 128, 128, 8
    $region5: #{tpu_custom_call.1} parent=1 // pred_fallthru
      _
    // Predicated region
    $region6: #{tpu_custom_call.1} parent=1 // pred_check
      _
    $region7: #{tpu_custom_call.1} parent=1 // pred_check_branch
      %30 = sbr.rel (0) target = $region9
    $region8: #{tpu_custom_call.1} parent=1 // pred_region
      %32 = vsyncadd [#allocation7], 0
      %s33 = sshll.u32 %s1, 4
      %s34 = int_to_ptr.hbm [resolvable:$true] %s33
      %s35 = sshll.u32 [#allocation6], 4
      %s36 = int_to_ptr.vmem [resolvable:$true] %s35
      %41 = dma.hbm_to_vmem [thread:$0]  %s34, 256, %s36, [#allocation7], 128, 128, 8
    $region9: #{tpu_custom_call.1} parent=1 // pred_fallthru
      _
    // Predicated region
    $region10: #{tpu_custom_call.1} parent=1 // pred_check
      _
    $region11: #{tpu_custom_call.1} parent=1 // pred_check_branch
      %43 = sbr.rel (0) target = $region13
    $region12: #{tpu_custom_call.1} parent=1 // pred_region
      %45 = vsyncadd [#allocation7], 0
      %s46 = sshll.u32 %s2, 4
      %s47 = int_to_ptr.hbm [resolvable:$true] %s46
      %s48 = sshll.u32 [#allocation8], 4
      %s49 = int_to_ptr.vmem [resolvable:$true] %s48
      %54 = dma.hbm_to_vmem [thread:$0]  %s47, 256, %s49, [#allocation7], 128, 128, 8
    $region13: #{tpu_custom_call.1} parent=1 // pred_fallthru
      _
    // Predicated region
    $region14: #{tpu_custom_call.1} parent=1 // pred_check
      _
    $region15: #{tpu_custom_call.1} parent=1 // pred_check_branch
      %56 = sbr.rel (0) target = $region17
    $region16: #{tpu_custom_call.1} parent=1 // pred_region
      %58 = vsyncadd [#allocation10], 0
      %s59 = sshll.u32 %s3, 4
      %s60 = int_to_ptr.hbm [resolvable:$true] %s59
      %s61 = sshll.u32 [#allocation9], 4
      %s62 = int_to_ptr.vmem [resolvable:$true] %s61
      %67 = dma.hbm_to_vmem [thread:$0]  %s60, 1536, %s62, [#allocation10], 128, 128, 8
    $region17: #{tpu_custom_call.1} parent=1 // pred_fallthru
      _
    // Predicated region
    $region18: #{tpu_custom_call.1} parent=1 // pred_check
      _
    $region19: #{tpu_custom_call.1} parent=1 // pred_check_branch
      %69 = sbr.rel (0) target = $region21
    $region20: #{tpu_custom_call.1} parent=1 // pred_region
      _
    $region21: #{tpu_custom_call.1} parent=1 // pred_fallthru
      _
    // Predicated region
    $region22: #{tpu_custom_call.1} parent=1 // pred_check
      _
    $region23: #{tpu_custom_call.1} parent=1 // pred_check_branch
      %71 = sbr.rel (0) target = $region25
    $region24: #{tpu_custom_call.1} parent=1 // pred_region
      %73 = vsyncadd [#allocation10], 0
      %s74 = sshll.u32 %s5, 4
      %s75 = int_to_ptr.hbm [resolvable:$true] %s74
      %s76 = sshll.u32 [#allocation11], 4
      %s77 = int_to_ptr.vmem [resolvable:$true] %s76
      %82 = dma.hbm_to_vmem [thread:$0]  %s75, 512, %s77, [#allocation10], 128, 128, 8
    $region25: #{tpu_custom_call.1} parent=1 // pred_fallthru
      _
    // Predicated region
    $region26: #{tpu_custom_call.1} parent=1 // pred_check
      _
    $region27: #{tpu_custom_call.1} parent=1 // pred_check_branch
      %84 = sbr.rel (0) target = $region29
    $region28: #{tpu_custom_call.1} parent=1 // pred_region
      _
    $region29: #{tpu_custom_call.1} parent=1 // pred_fallthru
      _
    // Predicated region
    $region30: #{tpu_custom_call.1} parent=1 // pred_check
      _
    $region31: #{tpu_custom_call.1} parent=1 // pred_check_branch
      %86 = sbr.rel (0) target = $region33
    $region32: #{tpu_custom_call.1} parent=1 // pred_region
      %88 = dma.done [#allocation4], 256
    $region33: #{tpu_custom_call.1} parent=1 // pred_fallthru
      _
    // Predicated region
    $region34: #{tpu_custom_call.1} parent=1 // pred_check
      _
    $region35: #{tpu_custom_call.1} parent=1 // pred_check_branch
      %90 = sbr.rel (0) target = $region37
    $region36: #{tpu_custom_call.1} parent=1 // pred_region
      %92 = dma.done [#allocation7], 256
    $region37: #{tpu_custom_call.1} parent=1 // pred_fallthru
      _
    // Predicated region
    $region38: #{tpu_custom_call.1} parent=1 // pred_check
      _
    $region39: #{tpu_custom_call.1} parent=1 // pred_check_branch
      %94 = sbr.rel (0) target = $region41
    $region40: #{tpu_custom_call.1} parent=1 // pred_region
      %96 = dma.done [#allocation7], 256
    $region41: #{tpu_custom_call.1} parent=1 // pred_fallthru
      _
    // Predicated region
    $region42: #{tpu_custom_call.1} parent=1 // pred_check
      _
    $region43: #{tpu_custom_call.1} parent=1 // pred_check_branch
      %98 = sbr.rel (0) target = $region45
    $region44: #{tpu_custom_call.1} parent=1 // pred_region
      %100 = dma.done [#allocation10], 1536
    $region45: #{tpu_custom_call.1} parent=1 // pred_fallthru
      _
    // Predicated region
    $region46: #{tpu_custom_call.1} parent=1 // pred_check
      _
    $region47: #{tpu_custom_call.1} parent=1 // pred_check_branch
      %102 = sbr.rel (0) target = $region49
    $region48: #{tpu_custom_call.1} parent=1 // pred_region
      %104 = dma.done [#allocation10], 512
    $region49: #{tpu_custom_call.1} parent=1 // pred_fallthru
      _
    %p105 = scmp.eq.s32.totalorder 0, 0
    // Predicated region
    $region50: #{tpu_custom_call.1} parent=1 // pred_check
      %p106 = pneg %p105
    $region51: #{tpu_custom_call.1} parent=1 // pred_check_branch
      %108 = sbr.rel (%p106) target = $region53
    $region52: #{tpu_custom_call.1} parent=1 // pred_region
      %vm109 = vcmask 261120
      %110 = vst.msk [vmem:[#allocation2] sm:$0xff] %vm109, 0.0
      %111 = vst.msk [vmem:[#allocation2 + $0x8] sm:$0xff] %vm109, 0.0
    $region53: #{tpu_custom_call.1} parent=1 // pred_fallthru
      _
    %v112 = vld [vmem:[#allocation3] sm:$0xff]
    %v113 = vld [vmem:[#allocation3 + $0x8] sm:$0xff]
    %v114 = vld [vmem:[#allocation6] sm:$0xff]
    %v115 = vld [vmem:[#allocation6 + $0x8] sm:$0xff]
    %v116 = vld [vmem:[#allocation8] sm:$0xff]
    %v117 = vld [vmem:[#allocation8 + $0x8] sm:$0xff]
    %v118 = vld [vmem:[#allocation9] sm:$0xff]
    %v119 = vld [vmem:[#allocation9 + $0x8] sm:$0xff]
    %v120 = vld [vmem:[#allocation9 + $0x10] sm:$0xff]
    %v121 = vld [vmem:[#allocation9 + $0x18] sm:$0xff]
    %v122 = vld [vmem:[#allocation9 + $0x20] sm:$0xff]
    %v123 = vld [vmem:[#allocation9 + $0x28] sm:$0xff]
    %v124 = vld [vmem:[#allocation9 + $0x30] sm:$0xff]
    %v125 = vld [vmem:[#allocation9 + $0x38] sm:$0xff]
    %v126 = vld [vmem:[#allocation9 + $0x40] sm:$0xff]
    %v127 = vld [vmem:[#allocation9 + $0x48] sm:$0xff]
    %v128 = vld [vmem:[#allocation9 + $0x50] sm:$0xff]
    %v129 = vld [vmem:[#allocation9 + $0x58] sm:$0xff]
    %v130 = vld [vmem:[%s4] sm:$0x1]
    %v131 = vld [vmem:[%s4 + $0x1] sm:$0x1]
    %v132 = vld [vmem:[%s4 + $0x2] sm:$0x1]
    %v134 = vperm.slane %v130, 0
    %vm136 = vcmask 261120
    %v138 = vsel %vm136, %v112, 0
    %v141 = vsel %vm136, %v113, 0
    %143 = vmatpush.msra.mxu0 0.0
    %144 = vmatpush.msra.mxu0 0.0
    %145 = vmatpush.msra.mxu0 0.0
    %146 = vmatpush.msra.mxu0 0.0
    %147 = vmatpush.msra.mxu0 0.0
    %148 = vmatpush.msra.mxu0 0.0
    %149 = vmatpush.msra.mxu0 0.0
    %150 = vmatpush.msra.mxu0 0.0
    %151 = vmatpush.msra.mxu0 0.0
    %152 = vmatpush.msra.mxu0 0.0
    %153 = vmatpush.msra.mxu0 0.0
    %154 = vmatpush.msra.mxu0 0.0
    %155 = vmatpush.msra.mxu0 %v121
    %156 = vmatpush.msra.mxu0 %v120
    %157 = vmatpush.msra.mxu0 %v119
    %158 = vmatpush.msra.mxu0 %v118
    %159 = vmatmul.f32.gmra.mxu0 %v138
    %v160 = vpop.f32.mrf.mxu0
    %v161 = vadd.f32 %v134, %v160
    %162 = vmatmul.f32.gmra.mxu0 %v141
    %v163 = vpop.f32.mrf.mxu0
    %v164 = vadd.f32 %v134, %v163
    %165 = vdwg.mxu0
    %v167 = vperm.slane %v131, 0
    %v170 = vsel %vm136, %v114, 0
    %v173 = vsel %vm136, %v115, 0
    %175 = vmatpush.msra.mxu0 0.0
    %176 = vmatpush.msra.mxu0 0.0
    %177 = vmatpush.msra.mxu0 0.0
    %178 = vmatpush.msra.mxu0 0.0
    %179 = vmatpush.msra.mxu0 0.0
    %180 = vmatpush.msra.mxu0 0.0
    %181 = vmatpush.msra.mxu0 0.0
    %182 = vmatpush.msra.mxu0 0.0
    %183 = vmatpush.msra.mxu0 0.0
    %184 = vmatpush.msra.mxu0 0.0
    %185 = vmatpush.msra.mxu0 0.0
    %186 = vmatpush.msra.mxu0 0.0
    %187 = vmatpush.msra.mxu0 %v125
    %188 = vmatpush.msra.mxu0 %v124
    %189 = vmatpush.msra.mxu0 %v123
    %190 = vmatpush.msra.mxu0 %v122
    %191 = vmatmul.f32.gmra.mxu0 %v170
    %v192 = vpop.f32.mrf.mxu0
    %v193 = vadd.f32 %v167, %v192
    %194 = vmatmul.f32.gmra.mxu0 %v173
    %v195 = vpop.f32.mrf.mxu0
    %v196 = vadd.f32 %v167, %v195
    %197 = vdwg.mxu0
    %v199 = vperm.slane %v132, 0
    %v202 = vsel %vm136, %v116, 0
    %v205 = vsel %vm136, %v117, 0
    %207 = vmatpush.msra.mxu0 0.0
    %208 = vmatpush.msra.mxu0 0.0
    %209 = vmatpush.msra.mxu0 0.0
    %210 = vmatpush.msra.mxu0 0.0
    %211 = vmatpush.msra.mxu0 0.0
    %212 = vmatpush.msra.mxu0 0.0
    %213 = vmatpush.msra.mxu0 0.0
    %214 = vmatpush.msra.mxu0 0.0
    %215 = vmatpush.msra.mxu0 0.0
    %216 = vmatpush.msra.mxu0 0.0
    %217 = vmatpush.msra.mxu0 0.0
    %218 = vmatpush.msra.mxu0 0.0
    %219 = vmatpush.msra.mxu0 %v129
    %220 = vmatpush.msra.mxu0 %v128
    %221 = vmatpush.msra.mxu0 %v127
    %222 = vmatpush.msra.mxu0 %v126
    %223 = vmatmul.f32.gmra.mxu0 %v202
    %v224 = vpop.f32.mrf.mxu0
    %v225 = vadd.f32 %v199, %v224
    %226 = vmatmul.f32.gmra.mxu0 %v205
    %v227 = vpop.f32.mrf.mxu0
    %v228 = vadd.f32 %v199, %v227
    %229 = vdwg.mxu0
    %vm230 = vcmask 64512
    %v232 = vsel %vm230, %v161, 0
    %v235 = vsel %vm230, %v193, 0
    %237 = vmatpush.xpose.msra.mxu0 0.0
    %238 = vmatpush.xpose.msra.mxu0 0.0
    %239 = vmatpush.xpose.msra.mxu0 0.0
    %240 = vmatpush.xpose.msra.mxu0 0.0
    %241 = vmatpush.xpose.msra.mxu0 0.0
    %242 = vmatpush.xpose.msra.mxu0 0.0
    %243 = vmatpush.xpose.msra.mxu0 0.0
    %244 = vmatpush.xpose.msra.mxu0 0.0
    %245 = vmatpush.xpose.msra.mxu0 0.0
    %246 = vmatpush.xpose.msra.mxu0 0.0
    %247 = vmatpush.xpose.msra.mxu0 0.0
    %248 = vmatpush.xpose.msra.mxu0 0.0
    %249 = vmatpush.xpose.msra.mxu0 0.0
    %250 = vmatpush.xpose.msra.mxu0 0.0
    %251 = vmatpush.xpose.msra.mxu0 0.0
    %252 = vmatpush.xpose.msra.mxu0 %v235
    %253 = vmatmul.f32.gmra.mxu0 %v232
    %v254 = vpop.f32.mrf.mxu0
    %v255 = vadd.f32 0.0, %v254
    %256 = vdwg.mxu0
    %v258 = vsel %vm230, %v164, 0
    %v261 = vsel %vm230, %v196, 0
    %263 = vmatpush.xpose.msra.mxu0 0.0
    %264 = vmatpush.xpose.msra.mxu0 0.0
    %265 = vmatpush.xpose.msra.mxu0 0.0
    %266 = vmatpush.xpose.msra.mxu0 0.0
    %267 = vmatpush.xpose.msra.mxu0 0.0
    %268 = vmatpush.xpose.msra.mxu0 0.0
    %269 = vmatpush.xpose.msra.mxu0 0.0
    %270 = vmatpush.xpose.msra.mxu0 0.0
    %271 = vmatpush.xpose.msra.mxu0 0.0
    %272 = vmatpush.xpose.msra.mxu0 0.0
    %273 = vmatpush.xpose.msra.mxu0 0.0
    %274 = vmatpush.xpose.msra.mxu0 0.0
    %275 = vmatpush.xpose.msra.mxu0 0.0
    %276 = vmatpush.xpose.msra.mxu0 0.0
    %277 = vmatpush.xpose.msra.mxu0 0.0
    %278 = vmatpush.xpose.msra.mxu0 %v261
    %279 = vmatmul.f32.gmra.mxu0 %v258
    %v280 = vpop.f32.mrf.mxu0
    %v281 = vadd.f32 0.0, %v280
    %282 = vdwg.mxu0
    %v283 = vmul.f32 %v255, 0.35355338
    %v284 = vmul.f32 %v281, 0.35355338
    %v285 = vsel %vm230, %v283, -inf
    %286 = vmax.xlane.f32.xlu0 %v285
    %v287 = vpop.xlane.xlu0 %286
    %v288 = vsel %vm230, %v284, -inf
    %289 = vmax.xlane.f32.xlu0 %v288
    %v290 = vpop.xlane.xlu0 %289
    %v291 = vsub.f32 %v283, %v287
    %v292 = vsub.f32 %v284, %v290
    %v293 = vmul.f32 %v291, 1.442695
    %v294 = vpow.pop %v293
    %v295 = vmul.f32 %v292, 1.442695
    %v296 = vpow.pop %v295
    %v297 = vsel %vm230, %v294, 0.0
    %298 = vadd.xlane.f32.xlu0 %v297
    %v299 = vpop.xlane.xlu0 %298
    %v300 = vsel %vm230, %v296, 0.0
    %301 = vadd.xlane.f32.xlu0 %v300
    %v302 = vpop.xlane.xlu0 %301
    %v303 = vrcp.pop %v299
    %v304 = vrcp.pop %v302
    %v305 = vmul.f32 %v294, %v303
    %v306 = vmul.f32 %v296, %v304
    %v308 = vsel %vm230, %v305, 0
    %310 = vmatpush.msra.mxu0 0.0
    %311 = vmatpush.msra.mxu0 0.0
    %312 = vmatpush.msra.mxu0 0.0
    %313 = vmatpush.msra.mxu0 0.0
    %314 = vmatpush.msra.mxu0 0.0
    %315 = vmatpush.msra.mxu0 0.0
    %316 = vmatpush.msra.mxu0 0.0
    %317 = vmatpush.msra.mxu0 0.0
    %318 = vmatpush.msra.mxu0 0.0
    %319 = vmatpush.msra.mxu0 0.0
    %320 = vmatpush.msra.mxu0 0.0
    %321 = vmatpush.msra.mxu0 0.0
    %322 = vmatpush.msra.mxu0 0.0
    %323 = vmatpush.msra.mxu0 0.0
    %324 = vmatpush.msra.mxu0 0.0
    %325 = vmatpush.msra.mxu0 %v225
    %326 = vmatmul.f32.gmra.mxu0 %v308
    %v327 = vpop.f32.mrf.mxu0
    %v328 = vadd.f32 0.0, %v327
    %329 = vdwg.mxu0
    %v331 = vsel %vm230, %v306, 0
    %333 = vmatpush.msra.mxu0 0.0
    %334 = vmatpush.msra.mxu0 0.0
    %335 = vmatpush.msra.mxu0 0.0
    %336 = vmatpush.msra.mxu0 0.0
    %337 = vmatpush.msra.mxu0 0.0
    %338 = vmatpush.msra.mxu0 0.0
    %339 = vmatpush.msra.mxu0 0.0
    %340 = vmatpush.msra.mxu0 0.0
    %341 = vmatpush.msra.mxu0 0.0
    %342 = vmatpush.msra.mxu0 0.0
    %343 = vmatpush.msra.mxu0 0.0
    %344 = vmatpush.msra.mxu0 0.0
    %345 = vmatpush.msra.mxu0 0.0
    %346 = vmatpush.msra.mxu0 0.0
    %347 = vmatpush.msra.mxu0 0.0
    %348 = vmatpush.msra.mxu0 %v228
    %349 = vmatmul.f32.gmra.mxu0 %v331
    %v350 = vpop.f32.mrf.mxu0
    %v351 = vadd.f32 0.0, %v350
    %352 = vdwg.mxu0
    %353 = vrot.lane.b32.xlu0 %v161, 120
    %v354 = vpop.permute.xlu0 %353
    %355 = vrot.lane.b32.xlu0 %v193, 120
    %v356 = vpop.permute.xlu0 %355
    %v357 = vsel %vm230, %v354, 0
    %v359 = vsel %vm230, %v356, 0
    %361 = vmatpush.xpose.msra.mxu0 0.0
    %362 = vmatpush.xpose.msra.mxu0 0.0
    %363 = vmatpush.xpose.msra.mxu0 0.0
    %364 = vmatpush.xpose.msra.mxu0 0.0
    %365 = vmatpush.xpose.msra.mxu0 0.0
    %366 = vmatpush.xpose.msra.mxu0 0.0
    %367 = vmatpush.xpose.msra.mxu0 0.0
    %368 = vmatpush.xpose.msra.mxu0 0.0
    %369 = vmatpush.xpose.msra.mxu0 0.0
    %370 = vmatpush.xpose.msra.mxu0 0.0
    %371 = vmatpush.xpose.msra.mxu0 0.0
    %372 = vmatpush.xpose.msra.mxu0 0.0
    %373 = vmatpush.xpose.msra.mxu0 0.0
    %374 = vmatpush.xpose.msra.mxu0 0.0
    %375 = vmatpush.xpose.msra.mxu0 0.0
    %376 = vmatpush.xpose.msra.mxu0 %v359
    %377 = vmatmul.f32.gmra.mxu0 %v357
    %v378 = vpop.f32.mrf.mxu0
    %v379 = vadd.f32 0.0, %v378
    %380 = vdwg.mxu0
    %381 = vrot.lane.b32.xlu0 %v164, 120
    %v382 = vpop.permute.xlu0 %381
    %383 = vrot.lane.b32.xlu0 %v196, 120
    %v384 = vpop.permute.xlu0 %383
    %v385 = vsel %vm230, %v382, 0
    %v387 = vsel %vm230, %v384, 0
    %389 = vmatpush.xpose.msra.mxu0 0.0
    %390 = vmatpush.xpose.msra.mxu0 0.0
    %391 = vmatpush.xpose.msra.mxu0 0.0
    %392 = vmatpush.xpose.msra.mxu0 0.0
    %393 = vmatpush.xpose.msra.mxu0 0.0
    %394 = vmatpush.xpose.msra.mxu0 0.0
    %395 = vmatpush.xpose.msra.mxu0 0.0
    %396 = vmatpush.xpose.msra.mxu0 0.0
    %397 = vmatpush.xpose.msra.mxu0 0.0
    %398 = vmatpush.xpose.msra.mxu0 0.0
    %399 = vmatpush.xpose.msra.mxu0 0.0
    %400 = vmatpush.xpose.msra.mxu0 0.0
    %401 = vmatpush.xpose.msra.mxu0 0.0
    %402 = vmatpush.xpose.msra.mxu0 0.0
    %403 = vmatpush.xpose.msra.mxu0 0.0
    %404 = vmatpush.xpose.msra.mxu0 %v387
    %405 = vmatmul.f32.gmra.mxu0 %v385
    %v406 = vpop.f32.mrf.mxu0
    %v407 = vadd.f32 0.0, %v406
    %408 = vdwg.mxu0
    %v409 = vmul.f32 %v379, 0.35355338
    %v410 = vmul.f32 %v407, 0.35355338
    %v411 = vsel %vm230, %v409, -inf
    %412 = vmax.xlane.f32.xlu0 %v411
    %v413 = vpop.xlane.xlu0 %412
    %v414 = vsel %vm230, %v410, -inf
    %415 = vmax.xlane.f32.xlu0 %v414
    %v416 = vpop.xlane.xlu0 %415
    %v417 = vsub.f32 %v409, %v413
    %v418 = vsub.f32 %v410, %v416
    %v419 = vmul.f32 %v417, 1.442695
    %v420 = vpow.pop %v419
    %v421 = vmul.f32 %v418, 1.442695
    %v422 = vpow.pop %v421
    %v423 = vsel %vm230, %v420, 0.0
    %424 = vadd.xlane.f32.xlu0 %v423
    %v425 = vpop.xlane.xlu0 %424
    %v426 = vsel %vm230, %v422, 0.0
    %427 = vadd.xlane.f32.xlu0 %v426
    %v428 = vpop.xlane.xlu0 %427
    %v429 = vrcp.pop %v425
    %v430 = vrcp.pop %v428
    %v431 = vmul.f32 %v420, %v429
    %v432 = vmul.f32 %v422, %v430
    %434 = vrot.lane.b32.xlu0 %v225, 120
    %v435 = vpop.permute.xlu0 %434
    %v438 = vsel %vm230, %v431, 0
    %440 = vmatpush.msra.mxu0 0.0
    %441 = vmatpush.msra.mxu0 0.0
    %442 = vmatpush.msra.mxu0 0.0
    %443 = vmatpush.msra.mxu0 0.0
    %444 = vmatpush.msra.mxu0 0.0
    %445 = vmatpush.msra.mxu0 0.0
    %446 = vmatpush.msra.mxu0 0.0
    %447 = vmatpush.msra.mxu0 0.0
    %448 = vmatpush.msra.mxu0 0.0
    %449 = vmatpush.msra.mxu0 0.0
    %450 = vmatpush.msra.mxu0 0.0
    %451 = vmatpush.msra.mxu0 0.0
    %452 = vmatpush.msra.mxu0 0.0
    %453 = vmatpush.msra.mxu0 0.0
    %454 = vmatpush.msra.mxu0 0.0
    %455 = vmatpush.msra.mxu0 %v435
    %456 = vmatmul.f32.gmra.mxu0 %v438
    %v457 = vpop.f32.mrf.mxu0
    %v458 = vadd.f32 0.0, %v457
    %459 = vdwg.mxu0
    %461 = vrot.lane.b32.xlu0 %v228, 120
    %v462 = vpop.permute.xlu0 %461
    %v465 = vsel %vm230, %v432, 0
    %467 = vmatpush.msra.mxu0 0.0
    %468 = vmatpush.msra.mxu0 0.0
    %469 = vmatpush.msra.mxu0 0.0
    %470 = vmatpush.msra.mxu0 0.0
    %471 = vmatpush.msra.mxu0 0.0
    %472 = vmatpush.msra.mxu0 0.0
    %473 = vmatpush.msra.mxu0 0.0
    %474 = vmatpush.msra.mxu0 0.0
    %475 = vmatpush.msra.mxu0 0.0
    %476 = vmatpush.msra.mxu0 0.0
    %477 = vmatpush.msra.mxu0 0.0
    %478 = vmatpush.msra.mxu0 0.0
    %479 = vmatpush.msra.mxu0 0.0
    %480 = vmatpush.msra.mxu0 0.0
    %481 = vmatpush.msra.mxu0 0.0
    %482 = vmatpush.msra.mxu0 %v462
    %483 = vmatmul.f32.gmra.mxu0 %v465
    %v484 = vpop.f32.mrf.mxu0
    %v485 = vadd.f32 0.0, %v484
    %486 = vdwg.mxu0
    %487 = vrot.lane.b32.xlu0 %v161, 112
    %v488 = vpop.permute.xlu0 %487
    %489 = vrot.lane.b32.xlu0 %v193, 112
    %v490 = vpop.permute.xlu0 %489
    %v491 = vsel %vm230, %v488, 0
    %v493 = vsel %vm230, %v490, 0
    %495 = vmatpush.xpose.msra.mxu0 0.0
    %496 = vmatpush.xpose.msra.mxu0 0.0
    %497 = vmatpush.xpose.msra.mxu0 0.0
    %498 = vmatpush.xpose.msra.mxu0 0.0
    %499 = vmatpush.xpose.msra.mxu0 0.0
    %500 = vmatpush.xpose.msra.mxu0 0.0
    %501 = vmatpush.xpose.msra.mxu0 0.0
    %502 = vmatpush.xpose.msra.mxu0 0.0
    %503 = vmatpush.xpose.msra.mxu0 0.0
    %504 = vmatpush.xpose.msra.mxu0 0.0
    %505 = vmatpush.xpose.msra.mxu0 0.0
    %506 = vmatpush.xpose.msra.mxu0 0.0
    %507 = vmatpush.xpose.msra.mxu0 0.0
    %508 = vmatpush.xpose.msra.mxu0 0.0
    %509 = vmatpush.xpose.msra.mxu0 0.0
    %510 = vmatpush.xpose.msra.mxu0 %v493
    %511 = vmatmul.f32.gmra.mxu0 %v491
    %v512 = vpop.f32.mrf.mxu0
    %v513 = vadd.f32 0.0, %v512
    %514 = vdwg.mxu0
    %515 = vrot.lane.b32.xlu0 %v164, 112
    %v516 = vpop.permute.xlu0 %515
    %517 = vrot.lane.b32.xlu0 %v196, 112
    %v518 = vpop.permute.xlu0 %517
    %v519 = vsel %vm230, %v516, 0
    %v521 = vsel %vm230, %v518, 0
    %523 = vmatpush.xpose.msra.mxu0 0.0
    %524 = vmatpush.xpose.msra.mxu0 0.0
    %525 = vmatpush.xpose.msra.mxu0 0.0
    %526 = vmatpush.xpose.msra.mxu0 0.0
    %527 = vmatpush.xpose.msra.mxu0 0.0
    %528 = vmatpush.xpose.msra.mxu0 0.0
    %529 = vmatpush.xpose.msra.mxu0 0.0
    %530 = vmatpush.xpose.msra.mxu0 0.0
    %531 = vmatpush.xpose.msra.mxu0 0.0
    %532 = vmatpush.xpose.msra.mxu0 0.0
    %533 = vmatpush.xpose.msra.mxu0 0.0
    %534 = vmatpush.xpose.msra.mxu0 0.0
    %535 = vmatpush.xpose.msra.mxu0 0.0
    %536 = vmatpush.xpose.msra.mxu0 0.0
    %537 = vmatpush.xpose.msra.mxu0 0.0
    %538 = vmatpush.xpose.msra.mxu0 %v521
    %539 = vmatmul.f32.gmra.mxu0 %v519
    %v540 = vpop.f32.mrf.mxu0
    %v541 = vadd.f32 0.0, %v540
    %542 = vdwg.mxu0
    %v543 = vmul.f32 %v513, 0.35355338
    %v544 = vmul.f32 %v541, 0.35355338
    %v545 = vsel %vm230, %v543, -inf
    %546 = vmax.xlane.f32.xlu0 %v545
    %v547 = vpop.xlane.xlu0 %546
    %v548 = vsel %vm230, %v544, -inf
    %549 = vmax.xlane.f32.xlu0 %v548
    %v550 = vpop.xlane.xlu0 %549
    %v551 = vsub.f32 %v543, %v547
    %v552 = vsub.f32 %v544, %v550
    %v553 = vmul.f32 %v551, 1.442695
    %v554 = vpow.pop %v553
    %v555 = vmul.f32 %v552, 1.442695
    %v556 = vpow.pop %v555
    %v557 = vsel %vm230, %v554, 0.0
    %558 = vadd.xlane.f32.xlu0 %v557
    %v559 = vpop.xlane.xlu0 %558
    %v560 = vsel %vm230, %v556, 0.0
    %561 = vadd.xlane.f32.xlu0 %v560
    %v562 = vpop.xlane.xlu0 %561
    %v563 = vrcp.pop %v559
    %v564 = vrcp.pop %v562
    %v565 = vmul.f32 %v554, %v563
    %v566 = vmul.f32 %v556, %v564
    %567 = vrot.lane.b32.xlu0 %v225, 112
    %v568 = vpop.permute.xlu0 %567
    %v571 = vsel %vm230, %v565, 0
    %573 = vmatpush.msra.mxu0 0.0
    %574 = vmatpush.msra.mxu0 0.0
    %575 = vmatpush.msra.mxu0 0.0
    %576 = vmatpush.msra.mxu0 0.0
    %577 = vmatpush.msra.mxu0 0.0
    %578 = vmatpush.msra.mxu0 0.0
    %579 = vmatpush.msra.mxu0 0.0
    %580 = vmatpush.msra.mxu0 0.0
    %581 = vmatpush.msra.mxu0 0.0
    %582 = vmatpush.msra.mxu0 0.0
    %583 = vmatpush.msra.mxu0 0.0
    %584 = vmatpush.msra.mxu0 0.0
    %585 = vmatpush.msra.mxu0 0.0
    %586 = vmatpush.msra.mxu0 0.0
    %587 = vmatpush.msra.mxu0 0.0
    %588 = vmatpush.msra.mxu0 %v568
    %589 = vmatmul.f32.gmra.mxu0 %v571
    %v590 = vpop.f32.mrf.mxu0
    %v591 = vadd.f32 0.0, %v590
    %592 = vdwg.mxu0
    %593 = vrot.lane.b32.xlu0 %v228, 112
    %v594 = vpop.permute.xlu0 %593
    %v597 = vsel %vm230, %v566, 0
    %599 = vmatpush.msra.mxu0 0.0
    %600 = vmatpush.msra.mxu0 0.0
    %601 = vmatpush.msra.mxu0 0.0
    %602 = vmatpush.msra.mxu0 0.0
    %603 = vmatpush.msra.mxu0 0.0
    %604 = vmatpush.msra.mxu0 0.0
    %605 = vmatpush.msra.mxu0 0.0
    %606 = vmatpush.msra.mxu0 0.0
    %607 = vmatpush.msra.mxu0 0.0
    %608 = vmatpush.msra.mxu0 0.0
    %609 = vmatpush.msra.mxu0 0.0
    %610 = vmatpush.msra.mxu0 0.0
    %611 = vmatpush.msra.mxu0 0.0
    %612 = vmatpush.msra.mxu0 0.0
    %613 = vmatpush.msra.mxu0 0.0
    %614 = vmatpush.msra.mxu0 %v594
    %615 = vmatmul.f32.gmra.mxu0 %v597
    %v616 = vpop.f32.mrf.mxu0
    %v617 = vadd.f32 0.0, %v616
    %618 = vdwg.mxu0
    %619 = vrot.lane.b32.xlu0 %v161, 104
    %v620 = vpop.permute.xlu0 %619
    %621 = vrot.lane.b32.xlu0 %v193, 104
    %v622 = vpop.permute.xlu0 %621
    %v623 = vsel %vm230, %v620, 0
    %v625 = vsel %vm230, %v622, 0
    %627 = vmatpush.xpose.msra.mxu0 0.0
    %628 = vmatpush.xpose.msra.mxu0 0.0
    %629 = vmatpush.xpose.msra.mxu0 0.0
    %630 = vmatpush.xpose.msra.mxu0 0.0
    %631 = vmatpush.xpose.msra.mxu0 0.0
    %632 = vmatpush.xpose.msra.mxu0 0.0
    %633 = vmatpush.xpose.msra.mxu0 0.0
    %634 = vmatpush.xpose.msra.mxu0 0.0
    %635 = vmatpush.xpose.msra.mxu0 0.0
    %636 = vmatpush.xpose.msra.mxu0 0.0
    %637 = vmatpush.xpose.msra.mxu0 0.0
    %638 = vmatpush.xpose.msra.mxu0 0.0
    %639 = vmatpush.xpose.msra.mxu0 0.0
    %640 = vmatpush.xpose.msra.mxu0 0.0
    %641 = vmatpush.xpose.msra.mxu0 0.0
    %642 = vmatpush.xpose.msra.mxu0 %v625
    %643 = vmatmul.f32.gmra.mxu0 %v623
    %v644 = vpop.f32.mrf.mxu0
    %v645 = vadd.f32 0.0, %v644
    %646 = vdwg.mxu0
    %647 = vrot.lane.b32.xlu0 %v164, 104
    %v648 = vpop.permute.xlu0 %647
    %649 = vrot.lane.b32.xlu0 %v196, 104
    %v650 = vpop.permute.xlu0 %649
    %v651 = vsel %vm230, %v648, 0
    %v653 = vsel %vm230, %v650, 0
    %655 = vmatpush.xpose.msra.mxu0 0.0
    %656 = vmatpush.xpose.msra.mxu0 0.0
    %657 = vmatpush.xpose.msra.mxu0 0.0
    %658 = vmatpush.xpose.msra.mxu0 0.0
    %659 = vmatpush.xpose.msra.mxu0 0.0
    %660 = vmatpush.xpose.msra.mxu0 0.0
    %661 = vmatpush.xpose.msra.mxu0 0.0
    %662 = vmatpush.xpose.msra.mxu0 0.0
    %663 = vmatpush.xpose.msra.mxu0 0.0
    %664 = vmatpush.xpose.msra.mxu0 0.0
    %665 = vmatpush.xpose.msra.mxu0 0.0
    %666 = vmatpush.xpose.msra.mxu0 0.0
    %667 = vmatpush.xpose.msra.mxu0 0.0
    %668 = vmatpush.xpose.msra.mxu0 0.0
    %669 = vmatpush.xpose.msra.mxu0 0.0
    %670 = vmatpush.xpose.msra.mxu0 %v653
    %671 = vmatmul.f32.gmra.mxu0 %v651
    %v672 = vpop.f32.mrf.mxu0
    %v673 = vadd.f32 0.0, %v672
    %674 = vdwg.mxu0
    %v675 = vmul.f32 %v645, 0.35355338
    %v676 = vmul.f32 %v673, 0.35355338
    %v677 = vsel %vm230, %v675, -inf
    %678 = vmax.xlane.f32.xlu0 %v677
    %v679 = vpop.xlane.xlu0 %678
    %v680 = vsel %vm230, %v676, -inf
    %681 = vmax.xlane.f32.xlu0 %v680
    %v682 = vpop.xlane.xlu0 %681
    %v683 = vsub.f32 %v675, %v679
    %v684 = vsub.f32 %v676, %v682
    %v685 = vmul.f32 %v683, 1.442695
    %v686 = vpow.pop %v685
    %v687 = vmul.f32 %v684, 1.442695
    %v688 = vpow.pop %v687
    %v689 = vsel %vm230, %v686, 0.0
    %690 = vadd.xlane.f32.xlu0 %v689
    %v691 = vpop.xlane.xlu0 %690
    %v692 = vsel %vm230, %v688, 0.0
    %693 = vadd.xlane.f32.xlu0 %v692
    %v694 = vpop.xlane.xlu0 %693
    %v695 = vrcp.pop %v691
    %v696 = vrcp.pop %v694
    %v697 = vmul.f32 %v686, %v695
    %v698 = vmul.f32 %v688, %v696
    %699 = vrot.lane.b32.xlu0 %v225, 104
    %v700 = vpop.permute.xlu0 %699
    %v703 = vsel %vm230, %v697, 0
    %705 = vmatpush.msra.mxu0 0.0
    %706 = vmatpush.msra.mxu0 0.0
    %707 = vmatpush.msra.mxu0 0.0
    %708 = vmatpush.msra.mxu0 0.0
    %709 = vmatpush.msra.mxu0 0.0
    %710 = vmatpush.msra.mxu0 0.0
    %711 = vmatpush.msra.mxu0 0.0
    %712 = vmatpush.msra.mxu0 0.0
    %713 = vmatpush.msra.mxu0 0.0
    %714 = vmatpush.msra.mxu0 0.0
    %715 = vmatpush.msra.mxu0 0.0
    %716 = vmatpush.msra.mxu0 0.0
    %717 = vmatpush.msra.mxu0 0.0
    %718 = vmatpush.msra.mxu0 0.0
    %719 = vmatpush.msra.mxu0 0.0
    %720 = vmatpush.msra.mxu0 %v700
    %721 = vmatmul.f32.gmra.mxu0 %v703
    %v722 = vpop.f32.mrf.mxu0
    %v723 = vadd.f32 0.0, %v722
    %724 = vdwg.mxu0
    %725 = vrot.lane.b32.xlu0 %v228, 104
    %v726 = vpop.permute.xlu0 %725
    %v729 = vsel %vm230, %v698, 0
    %731 = vmatpush.msra.mxu0 0.0
    %732 = vmatpush.msra.mxu0 0.0
    %733 = vmatpush.msra.mxu0 0.0
    %734 = vmatpush.msra.mxu0 0.0
    %735 = vmatpush.msra.mxu0 0.0
    %736 = vmatpush.msra.mxu0 0.0
    %737 = vmatpush.msra.mxu0 0.0
    %738 = vmatpush.msra.mxu0 0.0
    %739 = vmatpush.msra.mxu0 0.0
    %740 = vmatpush.msra.mxu0 0.0
    %741 = vmatpush.msra.mxu0 0.0
    %742 = vmatpush.msra.mxu0 0.0
    %743 = vmatpush.msra.mxu0 0.0
    %744 = vmatpush.msra.mxu0 0.0
    %745 = vmatpush.msra.mxu0 0.0
    %746 = vmatpush.msra.mxu0 %v726
    %747 = vmatmul.f32.gmra.mxu0 %v729
    %v748 = vpop.f32.mrf.mxu0
    %v749 = vadd.f32 0.0, %v748
    %750 = vdwg.mxu0
    %753 = vrot.lane.b32.xlu0 %v458, 8
    %v754 = vpop.permute.xlu0 %753
    %755 = vrot.lane.b32.xlu0 %v485, 8
    %v756 = vpop.permute.xlu0 %755
    %761 = vrot.lane.b32.xlu0 %v591, 16
    %v762 = vpop.permute.xlu0 %761
    %763 = vrot.lane.b32.xlu0 %v617, 16
    %v764 = vpop.permute.xlu0 %763
    %769 = vrot.lane.b32.xlu0 %v723, 24
    %v770 = vpop.permute.xlu0 %769
    %771 = vrot.lane.b32.xlu0 %v749, 24
    %v772 = vpop.permute.xlu0 %771
    %v775 = vsel %vm230, %v328, %v754
    %v776 = vsel %vm230, %v351, %v756
    %vm777 = vcmask 130048
    %v778 = vsel %vm777, %v775, %v762
    %v779 = vsel %vm777, %v776, %v764
    %vm780 = vcmask 195584
    %v781 = vsel %vm780, %v778, %v770
    %v782 = vsel %vm780, %v779, %v772
    %v783 = vld [vmem:[#allocation11] sm:$0xff]
    %v784 = vld [vmem:[#allocation11 + $0x8] sm:$0xff]
    %v785 = vld [vmem:[#allocation11 + $0x10] sm:$0xff]
    %v786 = vld [vmem:[#allocation11 + $0x18] sm:$0xff]
    %v787 = vld [vmem:[#allocation2] sm:$0xff]
    %v788 = vld [vmem:[#allocation2 + $0x8] sm:$0xff]
    %v790 = vsel %vm136, %v781, 0
    %v793 = vsel %vm136, %v782, 0
    %795 = vmatpush.msra.mxu0 0.0
    %796 = vmatpush.msra.mxu0 0.0
    %797 = vmatpush.msra.mxu0 0.0
    %798 = vmatpush.msra.mxu0 0.0
    %799 = vmatpush.msra.mxu0 0.0
    %800 = vmatpush.msra.mxu0 0.0
    %801 = vmatpush.msra.mxu0 0.0
    %802 = vmatpush.msra.mxu0 0.0
    %803 = vmatpush.msra.mxu0 0.0
    %804 = vmatpush.msra.mxu0 0.0
    %805 = vmatpush.msra.mxu0 0.0
    %806 = vmatpush.msra.mxu0 0.0
    %807 = vmatpush.msra.mxu0 %v786
    %808 = vmatpush.msra.mxu0 %v785
    %809 = vmatpush.msra.mxu0 %v784
    %810 = vmatpush.msra.mxu0 %v783
    %811 = vmatmul.f32.gmra.mxu0 %v790
    %v812 = vpop.f32.mrf.mxu0
    %v813 = vadd.f32 0.0, %v812
    %814 = vmatmul.f32.gmra.mxu0 %v793
    %v815 = vpop.f32.mrf.mxu0
    %v816 = vadd.f32 0.0, %v815
    %817 = vdwg.mxu0
    %v818 = vadd.f32 %v787, %v813
    %v819 = vadd.f32 %v788, %v816
    %820 = vst.msk [vmem:[#allocation2] sm:$0xff] %vm136, %v818
    %821 = vst.msk [vmem:[#allocation2 + $0x8] sm:$0xff] %vm136, %v819
    // Predicated region
    $region54: #{tpu_custom_call.1} parent=1 // pred_check
      %p822 = pneg %p105
    $region55: #{tpu_custom_call.1} parent=1 // pred_check_branch
      %824 = sbr.rel (%p822) target = $region57
    $region56: #{tpu_custom_call.1} parent=1 // pred_region
      %v825 = vld [vmem:[#allocation2] sm:$0xff]
      %v826 = vld [vmem:[#allocation2 + $0x8] sm:$0xff]
      %v827 = vld [vmem:[%s6] sm:$0x1]
      %v829 = vperm.slane %v827, 0
      %v831 = vadd.f32 %v825, %v829
      %v832 = vadd.f32 %v826, %v829
      %833 = vst.msk [vmem:[#allocation12] sm:$0xff] %vm136, %v831
      %834 = vst.msk [vmem:[#allocation12 + $0x8] sm:$0xff] %vm136, %v832
    $region57: #{tpu_custom_call.1} parent=1 // pred_fallthru
      _
    // Predicated region
    $region58: #{tpu_custom_call.1} parent=1 // pred_check
      _
    $region59: #{tpu_custom_call.1} parent=1 // pred_check_branch
      %836 = sbr.rel (0) target = $region61
    $region60: #{tpu_custom_call.1} parent=1 // pred_region
      %838 = vsyncadd [#allocation5], 0
      %s839 = sshll.u32 [#allocation12], 4
      %s840 = int_to_ptr.vmem [resolvable:$true] %s839
      %s841 = sshll.u32 %s7, 4
      %s842 = int_to_ptr.hbm [resolvable:$true] %s841
      %847 = dma.vmem_to_hbm [thread:$0]  %s840, 256, %s842, [#allocation5], 128, 128, 8
    $region61: #{tpu_custom_call.1} parent=1 // pred_fallthru
      _
    // Predicated region
    $region62: #{tpu_custom_call.1} parent=1 // pred_check
      _
    $region63: #{tpu_custom_call.1} parent=1 // pred_check_branch
      %849 = sbr.rel (0) target = $region65
    $region64: #{tpu_custom_call.1} parent=1 // pred_region
      %851 = dma.done [#allocation5], 256
    $region65: #{tpu_custom_call.1} parent=1 // pred_fallthru
      _
    %852 = vsyncpa [#allocation4], 1
    %853 = vsyncpa [#allocation7], 1
    %854 = vsyncpa [#allocation10], 1
    %855 = vsyncpa [#allocation5], 1

</llo_original>
